<compile_context>
chip_gen: v6e
topology: v6e:2x2x1
jax: 0.10.0
libtpu: 0.0.40
codegen_flags: <defaults>
</compile_context>

<pallas_src>
import numpy as np
import jax
import jax.numpy as jnp
from jax.experimental import pallas as pl
from jax.experimental.pallas import tpu as pltpu


# ----------------------------------------------------------------------------
# Small helpers
# ----------------------------------------------------------------------------
def _round_up(v, m):
    return ((v + m - 1) // m) * m


def _select_tile_m(rows, tile_m_max=512):
    """Pick the row-tile: big for MXU occupancy, but >= 2 grid steps if the
    input allows it (so v7x's two TensorCores both get work)."""
    if rows >= 2 * tile_m_max:
        return tile_m_max
    half = -(-rows // 2)                      # ceil(rows / 2)
    granule = 128 if half >= 128 else 8       # MXU granule, else sublane granule
    return _round_up(max(half, 1), granule)


# ----------------------------------------------------------------------------
# Deterministic "parameters" (buffers computed in __init__/forward)
# ----------------------------------------------------------------------------
def _hann_window(win_length):
    # torch.hann_window(win_length, periodic=False)  (module passes periodic=False)
    n = np.arange(win_length, dtype=np.float64)
    return 0.5 * (1.0 - np.cos(2.0 * np.pi * n / (win_length - 1)))


def _padded_window(n_fft, win_length):
    # torch.stft centers the win_length window inside n_fft
    win = np.zeros(n_fft, dtype=np.float64)
    lpad = (n_fft - win_length) // 2
    win[lpad:lpad + win_length] = _hann_window(win_length)
    return win


def _dft_cos_sin(n_fft, win_length):
    """Windowed real/imag DFT bases, torch.stft convention.
    Returns (wr, wi), each (n_fft, n_freq) float64."""
    win = _padded_window(n_fft, win_length)
    n_freq = n_fft // 2 + 1
    n = np.arange(n_fft, dtype=np.float64)[:, None]
    k = np.arange(n_freq, dtype=np.float64)[None, :]
    ang = 2.0 * np.pi * n * k / n_fft
    wr = win[:, None] * np.cos(ang)
    wi = -win[:, None] * np.sin(ang)
    return wr, wi


def _gammatone_filter_banks(nfilts, nfft, fs, low_freq, high_freq, order=4):
    # TODO(synk): approximates spafe.fbanks.gammatone_fbanks (ERB-spaced
    # 4th-order gammatone magnitude response, scale='constant'); deterministic
    # but not bit-exact with the external spafe library.
    EarQ, minBW = 9.26449, 24.7
    maxlen = nfft // 2 + 1
    c = EarQ * minBW
    m = np.arange(1, nfilts + 1, dtype=np.float64)
    cfreqs = -(c) + (high_freq + c) * np.exp(
        m * (np.log(low_freq + c) - np.log(high_freq + c)) / nfilts)
    cfreqs = cfreqs[::-1]                                      # ascending
    erb = ((cfreqs / EarQ) ** order + minBW ** order) ** (1.0 / order)
    b = 1.019 * erb
    freqs = np.arange(maxlen, dtype=np.float64) * fs / nfft
    resp = (1.0 + ((freqs[None, :] - cfreqs[:, None]) / b[:, None]) ** 2) \
           ** (-order / 2.0)
    return resp.astype(np.float32)                             # (nfilts, n_freq)


# ----------------------------------------------------------------------------
# Glue: pre-emphasis, reflect padding, framing (plain JAX)
# ----------------------------------------------------------------------------
def _prepare_frames(x, *, hopsize, n_fft):
    B, _ = x.shape
    x = x.astype(jnp.float32)
    # pre-emphasis conv1d, weight [[[-0.97, 1]]], valid
    xp = x[:, 1:] - 0.97 * x[:, :-1]                           # (B, T-1)
    # torch.stft center=True -> reflect pad n_fft//2 on both sides
    pad = n_fft // 2
    xpad = jnp.pad(xp, ((0, 0), (pad, pad)), mode="reflect")
    L = xp.shape[1]
    n_frames = 1 + L // hopsize
    # TODO(synk): when hopsize divides n_fft, the 4x frame duplication below
    # could be avoided by streaming hop-sized chunks and summing shifted
    # sub-matmuls in-kernel; skipped here (compute-bound kernel, secondary win).
    idx = hopsize * np.arange(n_frames)[:, None] + np.arange(n_fft)[None, :]
    frames = xpad[:, idx].reshape(B * n_frames, n_fft)         # (B*F, n_fft)
    return frames, B, n_frames


# ----------------------------------------------------------------------------
# Fused operands:
#   W      (n_fft, KP):  [cos(k=0..n_fft/2) | -sin(k=1..n_fft/2-1)]  (width n_fft)
#   Gt     (KP, MP)   :  gammatone^T with rows duplicated so power @ Gt sums
#                        re^2 and im^2 of every frequency bin; mels padded to 128.
# ----------------------------------------------------------------------------
def _fused_operands(n_mels, sr, win_length, n_fft, fmin, fmax):
    n_freq = n_fft // 2 + 1
    wr, wi = _dft_cos_sin(n_fft, win_length)                   # float64
    gt = _gammatone_filter_banks(n_mels, n_fft, sr, fmin, fmax).astype(np.float64)

    sin_cols = wi[:, 1:n_fft // 2]                             # drop k=0 & Nyquist (all-zero)
    w_fused = np.concatenate([wr, sin_cols], axis=1)           # (n_fft, n_fft)
    bins = np.concatenate([np.arange(n_freq), np.arange(1, n_fft // 2)])
    gt_fused = gt[:, bins].T                                   # (n_fft, n_mels)

    kp = _round_up(w_fused.shape[1], 128)                      # lane-align fused width
    mp = _round_up(n_mels, 128)                                # lane-dense output stores
    w_p = np.zeros((n_fft, kp), np.float32)
    w_p[:, :w_fused.shape[1]] = w_fused
    gt_p = np.zeros((kp, mp), np.float32)
    gt_p[:w_fused.shape[1], :n_mels] = gt_fused
    return w_p, gt_p, kp, mp


# ----------------------------------------------------------------------------
# Pallas kernel: fused windowed DFT -> power -> gammatone matmul -> log normalise
# ----------------------------------------------------------------------------
def _gammatone_stft_kernel(frames_ref, w_ref, gt_ref, out_ref):
    # bf16 x bf16 -> f32 accumulate (MXU): real & imag DFT in one matmul
    y = jnp.dot(frames_ref[...], w_ref[...],
                preferred_element_type=jnp.float32)            # (TM, KP)
    power = y * y                                              # f32 elementwise
    # gammatone filterbank: duplicated rows sum re^2 + im^2 per frequency bin
    spec = jnp.dot(power.astype(jnp.bfloat16), gt_ref[...],
                   preferred_element_type=jnp.float32)         # (TM, MP)
    out_ref[...] = (jnp.log(spec + 1e-5) + 4.5) / 5.0


def augment_gammatone_stft(x, *, n_mels=64, sr=8000, win_length=200,
                           hopsize=64, n_fft=256, fmin=0.0, fmax=None,
                           fmax_aug_range=1000, tile_m_max=512):
    if fmax is None:
        fmax = sr // 2 - fmax_aug_range // 2

    frames, B, n_frames = _prepare_frames(x, hopsize=hopsize, n_fft=n_fft)
    w_p, gt_p, kp, mp = _fused_operands(n_mels, sr, win_length, n_fft, fmin, fmax)

    BF = frames.shape[0]
    tile_m = _select_tile_m(BF, tile_m_max)
    BFp = _round_up(BF, tile_m)
    frames = jnp.pad(frames, ((0, BFp - BF), (0, 0))).astype(jnp.bfloat16)

    out = pl.pallas_call(
        _gammatone_stft_kernel,
        out_shape=jax.ShapeDtypeStruct((BFp, mp), jnp.float32),
        grid_spec=pltpu.PrefetchScalarGridSpec(
            num_scalar_prefetch=0,
            grid=(BFp // tile_m,),
            in_specs=[
                pl.BlockSpec((tile_m, n_fft), lambda i: (i, 0)),   # frame rows tile
                pl.BlockSpec((n_fft, kp), lambda i: (0, 0)),       # fused DFT basis
                pl.BlockSpec((kp, mp), lambda i: (0, 0)),          # fused gammatone^T
            ],
            out_specs=pl.BlockSpec((tile_m, mp), lambda i: (i, 0)),
        ),
        compiler_params=pltpu.CompilerParams(
            dimension_semantics=("parallel",)),
    )(frames,
      jnp.asarray(w_p, dtype=jnp.bfloat16),
      jnp.asarray(gt_p, dtype=jnp.bfloat16))

    out = out[:BF, :n_mels].reshape(B, n_frames, n_mels)       # drop row & mel padding
    return jnp.transpose(out, (0, 2, 1))                       # (B, n_mels, n_frames)


# ----------------------------------------------------------------------------
# Pure-JAX reference (straightforward non-fused math) for self-check.
#   matmul_dtype=float32  -> full module-semantics reference
#   matmul_dtype=bfloat16 -> precision-matched reference (same quantisation as kernel)
# ----------------------------------------------------------------------------
def _reference(x, *, n_mels, sr, win_length, hopsize, n_fft, fmin, fmax,
               fmax_aug_range, matmul_dtype=jnp.float32):
    if fmax is None:
        fmax = sr // 2 - fmax_aug_range // 2
    frames, B, n_frames = _prepare_frames(x, hopsize=hopsize, n_fft=n_fft)
    wr, wi = _dft_cos_sin(n_fft, win_length)
    gt = _gammatone_filter_banks(n_mels, n_fft, sr, fmin, fmax)     # (n_mels, n_freq)

    f = frames.astype(matmul_dtype)
    wr = jnp.asarray(wr.astype(np.float32)).astype(matmul_dtype)
    wi = jnp.asarray(wi.astype(np.float32)).astype(matmul_dtype)
    gtT = jnp.asarray(gt.T).astype(matmul_dtype)                    # (n_freq, n_mels)

    re = jnp.dot(f, wr, preferred_element_type=jnp.float32)
    im = jnp.dot(f, wi, preferred_element_type=jnp.float32)
    power = re * re + im * im
    spec = jnp.dot(power.astype(matmul_dtype), gtT,
                   preferred_element_type=jnp.float32)
    out = (jnp.log(spec + 1e-5) + 4.5) / 5.0
    return jnp.transpose(out.reshape(B, n_frames, n_mels), (0, 2, 1))


if __name__ == "__main__":
    cfg = dict(n_mels=64, sr=8000, win_length=200, hopsize=64, n_fft=256,
               fmin=0.0, fmax=None, fmax_aug_range=1000)

    key = jax.random.PRNGKey(0)
    B, T = 2, 2048                                             # small audio batch
    x = jax.random.normal(key, (B, T), dtype=jnp.float32)

    out = jax.block_until_ready(augment_gammatone_stft(x, **cfg))   # (2, 64, 32)

    # 1) Tight check vs precision-matched JAX reference (same bf16 quantisation,
    #    straightforward non-fused math) -> validates the Pallas kernel and the
    #    fused cos|sin / duplicated-gammatone packing.
    ref_bf16 = jax.block_until_ready(
        _reference(x, matmul_dtype=jnp.bfloat16, **cfg))
    np.testing.assert_allclose(np.asarray(out), np.asarray(ref_bf16),
                               rtol=2e-2, atol=2e-2)

    # 2) Aggregate closeness to the full-f32 module semantics.  bf16 input
    #    quantisation mainly perturbs the strongly pre-emphasis-attenuated
    #    lowest mel channels, so check mean absolute error rather than per-element.
    ref_f32 = jax.block_until_ready(
        _reference(x, matmul_dtype=jnp.float32, **cfg))
    mae = float(np.mean(np.abs(np.asarray(out) - np.asarray(ref_f32))))
    assert mae < 2e-2, f"mean abs err vs f32 reference too large: {mae}"

    print("KERNEL_OK")
</pallas_src>

<mosaic_0001>
module attributes {stable_mosaic.version = 11 : i64} {
  func.func @_gammatone_stft_kernel(%arg0: i32, %arg1: memref<32x256xbf16, #tpu.memory_space<vmem>>, %arg2: memref<256x256xbf16, #tpu.memory_space<vmem>>, %arg3: memref<256x128xbf16, #tpu.memory_space<vmem>>, %arg4: memref<32x128xf32, #tpu.memory_space<vmem>>) attributes {dimension_semantics = [#tpu.dimension_semantics<parallel>], iteration_bounds = array<i64: 2>, scalar_prefetch = 0 : i64, scratch_operands = 0 : i64, tpu.core_type = #tpu.core_type<tc>, window_params = [{transform_indices = @transform_0, window_bounds = array<i64: 32, 256>}, {pipeline_mode = #tpu.pipeline_mode<synchronous>, transform_indices = @transform_1, window_bounds = array<i64: 256, 256>}, {pipeline_mode = #tpu.pipeline_mode<synchronous>, transform_indices = @transform_2, window_bounds = array<i64: 256, 128>}, {transform_indices = @transform_3, window_bounds = array<i64: 32, 128>}]} {
    %c0 = arith.constant 0 : index
    %c0_0 = arith.constant 0 : index
    %0 = vector.load %arg1[%c0, %c0_0] : memref<32x256xbf16, #tpu.memory_space<vmem>>, vector<32x256xbf16>
    %c0_1 = arith.constant 0 : index
    %c0_2 = arith.constant 0 : index
    %1 = vector.load %arg2[%c0_1, %c0_2] : memref<256x256xbf16, #tpu.memory_space<vmem>>, vector<256x256xbf16>
    %cst = arith.constant dense<0.000000e+00> : vector<32x256xf32>
    %2 = tpu.matmul %0, %1, %cst {dimension_numbers = #tpu.dot_dimension_numbers<[1], [0], [0], [1], [0, 0, 1, 1], [], []>} : vector<32x256xbf16>, vector<256x256xbf16>, vector<32x256xf32> -> vector<32x256xf32>
    %3 = arith.mulf %2, %2 : vector<32x256xf32>
    %4 = arith.truncf %3 : vector<32x256xf32> to vector<32x256xbf16>
    %c0_3 = arith.constant 0 : index
    %c0_4 = arith.constant 0 : index
    %5 = vector.load %arg3[%c0_3, %c0_4] : memref<256x128xbf16, #tpu.memory_space<vmem>>, vector<256x128xbf16>
    %cst_5 = arith.constant dense<0.000000e+00> : vector<32x128xf32>
    %6 = tpu.matmul %4, %5, %cst_5 {dimension_numbers = #tpu.dot_dimension_numbers<[1], [0], [0], [1], [0, 0, 1, 1], [], []>} : vector<32x256xbf16>, vector<256x128xbf16>, vector<32x128xf32> -> vector<32x128xf32>
    %cst_6 = arith.constant 9.99999974E-6 : f32
    %7 = vector.broadcast %cst_6 : f32 to vector<32x128xf32>
    %8 = arith.addf %6, %7 : vector<32x128xf32>
    %9 = math.log %8 : vector<32x128xf32>
    %cst_7 = arith.constant 4.500000e+00 : f32
    %10 = vector.broadcast %cst_7 : f32 to vector<32x128xf32>
    %11 = arith.addf %9, %10 : vector<32x128xf32>
    %cst_8 = arith.constant 5.000000e+00 : f32
    %12 = vector.broadcast %cst_8 : f32 to vector<32x128xf32>
    %13 = arith.divf %11, %12 : vector<32x128xf32>
    %c0_9 = arith.constant 0 : index
    %c0_10 = arith.constant 0 : index
    %14 = vector.load %arg4[%c0_9, %c0_10] : memref<32x128xf32, #tpu.memory_space<vmem>>, vector<32x128xf32>
    tpu.vector_store %arg4[%c0_9, %c0_10], %13 {strides = array<i32>} : memref<32x128xf32, #tpu.memory_space<vmem>>, vector<32x128xf32>,
    return
  }
  func.func @transform_0(%arg0: i32) -> (i32, i32) {
    %c0_i32 = arith.constant 0 : i32
    %c0_i32_0 = arith.constant 0 : i32
    return %arg0, %c0_i32 : i32, i32
  }
  func.func @transform_1(%arg0: i32) -> (i32, i32) {
    %c0_i32 = arith.constant 0 : i32
    %c0_i32_0 = arith.constant 0 : i32
    %c0_i32_1 = arith.constant 0 : i32
    return %c0_i32, %c0_i32_0 : i32, i32
  }
  func.func @transform_2(%arg0: i32) -> (i32, i32) {
    %c0_i32 = arith.constant 0 : i32
    %c0_i32_0 = arith.constant 0 : i32
    %c0_i32_1 = arith.constant 0 : i32
    return %c0_i32, %c0_i32_0 : i32, i32
  }
  func.func @transform_3(%arg0: i32) -> (i32, i32) {
    %c0_i32 = arith.constant 0 : i32
    %c0_i32_0 = arith.constant 0 : i32
    return %arg0, %c0_i32 : i32, i32
  }
}

</mosaic_0001>

<llo_original>
// kernel: tpu_custom_call.1
$region0: #{tpu_custom_call.1}
  #allocation0 [shape = 'u32[]', space=smem, size = 0x4, offset = 0x4, fixed_abs, tag = 'smem constant byte address 0x4 - core index']
  #allocation1 [shape = 'u32[144,128]{1,0:T(1,128)}', space=vmem, size = 0x12000, scoped, tag = 'internal scratch']
  %s0 = inlined_call_operand.hbm [shape: bf16[64,256], index: 0, kind: input, shape index: {}]
  %s1 = inlined_call_operand.hbm [shape: bf16[256,256], index: 1, kind: input, shape index: {}]
  %s2 = inlined_call_operand.hbm [shape: bf16[256,128], index: 2, kind: input, shape index: {}]
  %s3 = inlined_call_operand.hbm [shape: f32[64,128], index: 3, kind: output, shape index: {}]
  %s4 = sld [smem:[#allocation0]]
  $region57: #{tpu_custom_call.1} parent=0
    _
  %s6 = ssub.s32 1, %s4
  %s7 = scalar_select 0, %s6, %s4
  $region1: #{tpu_custom_call.1} parent=0
    #allocation2 [shape = 'u8[32768]{0}', space=vmem, size = 0x8000, scoped, tag = 'input window, operand 0']
    #allocation3 [shape = 's32[2]{0}', space=sflag, size = 0x8, scoped, tag = 'scoped memory for tpu_custom_call.1']
    #allocation4 [shape = 's32[2]{0}', space=sflag, size = 0x8, scoped, tag = 'scoped memory for tpu_custom_call.1']
    #allocation5 [shape = 'u8[131072]{0}', space=vmem, size = 0x20000, scoped, tag = 'input window, operand 1, single buffered']
    #allocation6 [shape = 's32[1]{0}', space=sflag, size = 0x4, scoped, tag = 'scoped memory for tpu_custom_call.1']
    #allocation7 [shape = 'u8[65536]{0}', space=vmem, size = 0x10000, scoped, tag = 'input window, operand 2, single buffered']
    #allocation8 [shape = 'u8[32768]{0}', space=vmem, size = 0x8000, scoped, tag = 'output window, operand 0']
    %8 = vsyncpa [#allocation3], 0
    %s9 = scalar_lea.sflag [#allocation3], 1
    %10 = vsyncpa %s9, 0
    %11 = vsyncpa [#allocation6], 0
    %12 = vsyncpa [#allocation4], 0
    %s13 = scalar_lea.sflag [#allocation4], 1
    %14 = vsyncpa %s13, 0
    loop: start=0, step=1, limit=4
    $region2: #{tpu_custom_call.1} parent=1 // loop_pre_header
      _
    $region3: #{tpu_custom_call.1} parent=1 // loop_header
      %s16 = sphi 0, %s20
      %p17 = scmp.ge.s32.totalorder %s16, 4
      %s26 = sphi 0, %s28
      %s29 = sphi 0, %s26
      %s30 = sphi 0, %s29
      %s46 = sphi 0, %s30
      %s50 = sphi 0, %s50
      %s52 = sphi 0, %s50
      %s53 = sphi 0, %s52
      %s67 = sphi 0, %s53
      %s71 = sphi 0, %s71
      %s73 = sphi 0, %s71
      %s74 = sphi 0, %s73
      %s88 = sphi 0, %s74
      %s94 = sphi 0, %s96
      %s97 = sphi 0, %s94
      %s98 = sphi 0, %s97
      %s114 = sphi 0, %s98
    $region4: #{tpu_custom_call.1} parent=1 // loop_header_branch
      %19 = sbr.rel (%p17) target = $region8
    $region5: #{tpu_custom_call.1} parent=1 // loop_body
      %s21 = ssub.s32 %s16, 1
      %s22 = ssub.s32 %s16, 2
      %s23 = sadd.s32 %s16, 1
      %s24 = ssub.s32 %s16, %s23
      %p25 = scmp.eq.s32.totalorder %s24, 0
      %s27 = sadd.s32 %s26, 1
      %s28 = scalar_select %p25, %s26, %s27
      %p31 = pneg %p25
      %p32 = scmp.eq.s32.totalorder %s16, 1
      %p33 = por %p31, %p32
      %p34 = scmp.ne.s32.totalorder %s26, %s29
      %p35 = scmp.eq.s32.totalorder %s16, 0
      %p36 = por %p34, %p35
      %p37 = scmp.ne.s32.totalorder %s26, %s29
      %p38 = scmp.eq.s32.totalorder %s21, 1
      %p39 = por %p37, %p38
      %p40 = scmp.ne.s32.totalorder %s29, %s30
      %p41 = scmp.eq.s32.totalorder %s21, 0
      %p42 = por %p40, %p41
      %p43 = scmp.ne.s32.totalorder %s29, %s30
      %p44 = scmp.eq.s32.totalorder %s22, 1
      %p45 = por %p43, %p44
      %p47 = scmp.ne.s32.totalorder %s30, %s46
      %p48 = scmp.eq.s32.totalorder %s22, 0
      %p49 = por %p47, %p48
      %s51 = sadd.s32 %s50, 1
      %p54 = scmp.eq.s32.totalorder %s16, 1
      %p55 = scmp.ne.s32.totalorder %s50, %s52
      %p56 = scmp.eq.s32.totalorder %s16, 0
      %p57 = por %p55, %p56
      %p58 = scmp.ne.s32.totalorder %s50, %s52
      %p59 = scmp.eq.s32.totalorder %s21, 1
      %p60 = por %p58, %p59
      %p61 = scmp.ne.s32.totalorder %s52, %s53
      %p62 = scmp.eq.s32.totalorder %s21, 0
      %p63 = por %p61, %p62
      %p64 = scmp.ne.s32.totalorder %s52, %s53
      %p65 = scmp.eq.s32.totalorder %s22, 1
      %p66 = por %p64, %p65
      %p68 = scmp.ne.s32.totalorder %s53, %s67
      %p69 = scmp.eq.s32.totalorder %s22, 0
      %p70 = por %p68, %p69
      %s72 = sadd.s32 %s71, 1
      %p75 = scmp.eq.s32.totalorder %s16, 1
      %p76 = scmp.ne.s32.totalorder %s71, %s73
      %p77 = scmp.eq.s32.totalorder %s16, 0
      %p78 = por %p76, %p77
      %p79 = scmp.ne.s32.totalorder %s71, %s73
      %p80 = scmp.eq.s32.totalorder %s21, 1
      %p81 = por %p79, %p80
      %p82 = scmp.ne.s32.totalorder %s73, %s74
      %p83 = scmp.eq.s32.totalorder %s21, 0
      %p84 = por %p82, %p83
      %p85 = scmp.ne.s32.totalorder %s73, %s74
      %p86 = scmp.eq.s32.totalorder %s22, 1
      %p87 = por %p85, %p86
      %p89 = scmp.ne.s32.totalorder %s74, %s88
      %p90 = scmp.eq.s32.totalorder %s22, 0
      %p91 = por %p89, %p90
      %s92 = ssub.s32 %s16, %s23
      %p93 = scmp.eq.s32.totalorder %s92, 0
      %s95 = sadd.s32 %s94, 1
      %s96 = scalar_select %p93, %s94, %s95
      %p99 = pneg %p93
      %p100 = scmp.eq.s32.totalorder %s16, 1
      %p101 = por %p99, %p100
      %p102 = scmp.ne.s32.totalorder %s94, %s97
      %p103 = scmp.eq.s32.totalorder %s16, 0
      %p104 = por %p102, %p103
      %p105 = scmp.ne.s32.totalorder %s94, %s97
      %p106 = scmp.eq.s32.totalorder %s21, 1
      %p107 = por %p105, %p106
      %p108 = scmp.ne.s32.totalorder %s97, %s98
      %p109 = scmp.eq.s32.totalorder %s21, 0
      %p110 = por %p108, %p109
      %p111 = scmp.ne.s32.totalorder %s97, %s98
      %p112 = scmp.eq.s32.totalorder %s22, 1
      %p113 = por %p111, %p112
      %p115 = scmp.ne.s32.totalorder %s98, %s114
      %p116 = scmp.eq.s32.totalorder %s22, 0
      %p117 = por %p115, %p116
      %p118 = scmp.le.s32.totalorder 1, %s16
      %p119 = scmp.lt.s32.totalorder %s16, 3
      %p120 = pnand %p118, %p119
      %p121 = pneg %p120
      // Predicated region
      $region9: #{tpu_custom_call.1} parent=5 // pred_check
        _
      $region10: #{tpu_custom_call.1} parent=5 // pred_check_branch
        %123 = sbr.rel (%p120) target = $region12
      $region11: #{tpu_custom_call.1} parent=5 // pred_region
        %s124 = ssub.s32 %s16, 1
        // Predicated region
        $region13: #{tpu_custom_call.1} parent=11 // pred_check
          %p125 = pneg %p63
        $region14: #{tpu_custom_call.1} parent=11 // pred_check_branch
          %127 = sbr.rel (%p125) target = $region16
        $region15: #{tpu_custom_call.1} parent=11 // pred_region
          %s129 = ssub.s32 4096, 4096
          %130 = vsyncadd [#allocation6], %s129
          %s131 = sshll.u32 [#allocation5], 4
          %s132 = int_to_ptr.vmem [resolvable:$true] %s131
          %137 = dma.hbm_to_vmem [thread:$0]  %s1, 4096, %s132, [#allocation6], 128, 128, 8
        $region16: #{tpu_custom_call.1} parent=11 // pred_fallthru
          _
        // Predicated region
        $region17: #{tpu_custom_call.1} parent=11 // pred_check
          %p138 = pneg %p84
        $region18: #{tpu_custom_call.1} parent=11 // pred_check_branch
          %140 = sbr.rel (%p138) target = $region20
        $region19: #{tpu_custom_call.1} parent=11 // pred_region
          %s142 = ssub.s32 2048, 2048
          %143 = vsyncadd [#allocation6], %s142
          %s144 = sshll.u32 [#allocation7], 4
          %s145 = int_to_ptr.vmem [resolvable:$true] %s144
          %150 = dma.hbm_to_vmem [thread:$0]  %s2, 2048, %s145, [#allocation6], 64, 64, 4
        $region20: #{tpu_custom_call.1} parent=11 // pred_fallthru
          _
      $region12: #{tpu_custom_call.1} parent=5 // pred_fallthru
        _
      %p151 = scmp.lt.s32.totalorder %s16, 2
      // Predicated region
      $region21: #{tpu_custom_call.1} parent=5 // pred_check
        %p152 = pneg %p151
      $region22: #{tpu_custom_call.1} parent=5 // pred_check_branch
        %154 = sbr.rel (%p152) target = $region24
      $region23: #{tpu_custom_call.1} parent=5 // pred_region
        // Predicated region
        $region25: #{tpu_custom_call.1} parent=23 // pred_check
          %p155 = pneg %p36
        $region26: #{tpu_custom_call.1} parent=23 // pred_check_branch
          %157 = sbr.rel (%p155) target = $region28
        $region27: #{tpu_custom_call.1} parent=23 // pred_region
          %s158 = sand.u32 %s26, 1
          %s159 = scalar_lea.sflag [#allocation3], %s158
          %s160 = sand.u32 %s26, 1
          %s161 = smul.addr %s160, 32
          %s162 = scalar_lea.vmem [#allocation2], %s161
          %s163 = smul.u32 4, %s16
          %s165 = ssub.s32 512, 512
          %166 = vsyncadd %s159, %s165
          %s167 = smul.addr %s163, 2
          %s168 = smul.addr %s167, 64
          %s169 = scalar_lea.hbm %s0, %s168
          %s170 = sshll.u32 %s162, 4
          %s171 = int_to_ptr.vmem [resolvable:$true] %s170
          %176 = dma.hbm_to_vmem [thread:$0]  %s169, 512, %s171, %s159, 128, 128, 8
        $region28: #{tpu_custom_call.1} parent=23 // pred_fallthru
          _
      $region24: #{tpu_custom_call.1} parent=5 // pred_fallthru
        _
      %p177 = scmp.le.s32.totalorder 1, %s16
      %p178 = scmp.lt.s32.totalorder %s16, 3
      %p179 = pnand %p177, %p178
      %p180 = pneg %p179
      // Predicated region
      $region29: #{tpu_custom_call.1} parent=5 // pred_check
        _
      $region30: #{tpu_custom_call.1} parent=5 // pred_check_branch
        %182 = sbr.rel (%p179) target = $region32
      $region31: #{tpu_custom_call.1} parent=5 // pred_region
        %s183 = ssub.s32 %s16, 1
        %s184 = sand.u32 %s29, 1
        %s185 = scalar_lea.sflag [#allocation3], %s184
        %s186 = sand.u32 %s29, 1
        %s187 = smul.addr %s186, 32
        %s188 = scalar_lea.vmem [#allocation2], %s187
        // Predicated region
        $region33: #{tpu_custom_call.1} parent=31 // pred_check
          %p189 = pneg %p42
        $region34: #{tpu_custom_call.1} parent=31 // pred_check_branch
          %191 = sbr.rel (%p189) target = $region36
        $region35: #{tpu_custom_call.1} parent=31 // pred_region
          %192 = dma.done %s185, 512
        $region36: #{tpu_custom_call.1} parent=31 // pred_fallthru
          _
        // Predicated region
        $region37: #{tpu_custom_call.1} parent=31 // pred_check
          %p193 = pneg %p63
        $region38: #{tpu_custom_call.1} parent=31 // pred_check_branch
          %195 = sbr.rel (%p193) target = $region40
        $region39: #{tpu_custom_call.1} parent=31 // pred_region
          %196 = dma.done [#allocation6], 4096
        $region40: #{tpu_custom_call.1} parent=31 // pred_fallthru
          _
        // Predicated region
        $region41: #{tpu_custom_call.1} parent=31 // pred_check
          %p197 = pneg %p84
        $region42: #{tpu_custom_call.1} parent=31 // pred_check_branch
          %199 = sbr.rel (%p197) target = $region44
        $region43: #{tpu_custom_call.1} parent=31 // pred_region
          %200 = dma.done [#allocation6], 2048
        $region44: #{tpu_custom_call.1} parent=31 // pred_fallthru
          _
        %s201 = sand.u32 %s29, 1
        %s202 = scalar_lea.sflag [#allocation3], %s201
        %s203 = sand.u32 %s29, 1
        %s204 = smul.addr %s203, 32
        %s205 = scalar_lea.vmem [#allocation2], %s204
        %p206 = pneg %p42
        %p207 = pneg %p39
        %p208 = pneg %p63
        %p209 = pneg %p60
        %p210 = pneg %p84
        %p211 = pneg %p81
        %p212 = pneg %p110
        %p213 = pneg %p107
        %s214 = sand.u32 %s97, 1
        %s215 = scalar_lea.sflag [#allocation4], %s214
        %s216 = sand.u32 %s97, 1
        %s217 = smul.addr %s216, 32
        %s218 = scalar_lea.vmem [#allocation8], %s217
        %s219 = smul.u32 4, %s21
        %s220 = smul.u32 4, %s21
        %v222 = vld [vmem:[%s188] sm:$0xff]
        %v223 = vld [vmem:[%s188 + $0x8] sm:$0xff]
        %v224 = vld [vmem:[%s188 + $0x10] sm:$0xff]
        %v225 = vld [vmem:[%s188 + $0x18] sm:$0xff]
        %v226 = vld [vmem:[#allocation5] sm:$0xff]
        %v227 = vld [vmem:[#allocation5 + $0x8] sm:$0xff]
        %v228 = vld [vmem:[#allocation5 + $0x10] sm:$0xff]
        %v229 = vld [vmem:[#allocation5 + $0x18] sm:$0xff]
        %v230 = vld [vmem:[#allocation5 + $0x20] sm:$0xff]
        %v231 = vld [vmem:[#allocation5 + $0x28] sm:$0xff]
        %v232 = vld [vmem:[#allocation5 + $0x30] sm:$0xff]
        %v233 = vld [vmem:[#allocation5 + $0x38] sm:$0xff]
        %v234 = vld [vmem:[#allocation5 + $0x40] sm:$0xff]
        %v235 = vld [vmem:[#allocation5 + $0x48] sm:$0xff]
        %v236 = vld [vmem:[#allocation5 + $0x50] sm:$0xff]
        %v237 = vld [vmem:[#allocation5 + $0x58] sm:$0xff]
        %v238 = vld [vmem:[#allocation5 + $0x60] sm:$0xff]
        %v239 = vld [vmem:[#allocation5 + $0x68] sm:$0xff]
        %v240 = vld [vmem:[#allocation5 + $0x70] sm:$0xff]
        %v241 = vld [vmem:[#allocation5 + $0x78] sm:$0xff]
        %v242 = vld [vmem:[#allocation5 + $0x80] sm:$0xff]
        %v243 = vld [vmem:[#allocation5 + $0x88] sm:$0xff]
        %v244 = vld [vmem:[#allocation5 + $0x90] sm:$0xff]
        %v245 = vld [vmem:[#allocation5 + $0x98] sm:$0xff]
        %v246 = vld [vmem:[#allocation5 + $0xa0] sm:$0xff]
        %v247 = vld [vmem:[#allocation5 + $0xa8] sm:$0xff]
        %v248 = vld [vmem:[#allocation5 + $0xb0] sm:$0xff]
        %v249 = vld [vmem:[#allocation5 + $0xb8] sm:$0xff]
        %v250 = vld [vmem:[#allocation5 + $0xc0] sm:$0xff]
        %v251 = vld [vmem:[#allocation5 + $0xc8] sm:$0xff]
        %v252 = vld [vmem:[#allocation5 + $0xd0] sm:$0xff]
        %v253 = vld [vmem:[#allocation5 + $0xd8] sm:$0xff]
        %v254 = vld [vmem:[#allocation5 + $0xe0] sm:$0xff]
        %v255 = vld [vmem:[#allocation5 + $0xe8] sm:$0xff]
        %v256 = vld [vmem:[#allocation5 + $0xf0] sm:$0xff]
        %v257 = vld [vmem:[#allocation5 + $0xf8] sm:$0xff]
        %v262 = vunpack.c.l.b16 %v222
        %v263 = vunpack.c.h.b16 %v222
        %v264 = vunpack.c.l.b16 %v223
        %v265 = vunpack.c.h.b16 %v223
        %v266 = vunpack.c.l.b16 %v224
        %v267 = vunpack.c.h.b16 %v224
        %v268 = vunpack.c.l.b16 %v225
        %v269 = vunpack.c.h.b16 %v225
        %v270 = vpack.c.b16 %v264, %v262
        %v271 = vpack.c.b16 %v265, %v263
        %v272 = vpack.c.b16 %v268, %v266
        %v273 = vpack.c.b16 %v269, %v267
        %v310 = vunpack.c.l.b16 %v226
        %v311 = vunpack.c.h.b16 %v226
        %v312 = vunpack.c.l.b16 %v227
        %v313 = vunpack.c.h.b16 %v227
        %v314 = vunpack.c.l.b16 %v228
        %v315 = vunpack.c.h.b16 %v228
        %v316 = vunpack.c.l.b16 %v229
        %v317 = vunpack.c.h.b16 %v229
        %v318 = vunpack.c.l.b16 %v230
        %v319 = vunpack.c.h.b16 %v230
        %v320 = vunpack.c.l.b16 %v231
        %v321 = vunpack.c.h.b16 %v231
        %v322 = vunpack.c.l.b16 %v232
        %v323 = vunpack.c.h.b16 %v232
        %v324 = vunpack.c.l.b16 %v233
        %v325 = vunpack.c.h.b16 %v233
        %v326 = vunpack.c.l.b16 %v234
        %v327 = vunpack.c.h.b16 %v234
        %v328 = vunpack.c.l.b16 %v235
        %v329 = vunpack.c.h.b16 %v235
        %v330 = vunpack.c.l.b16 %v236
        %v331 = vunpack.c.h.b16 %v236
        %v332 = vunpack.c.l.b16 %v237
        %v333 = vunpack.c.h.b16 %v237
        %v334 = vunpack.c.l.b16 %v238
        %v335 = vunpack.c.h.b16 %v238
        %v336 = vunpack.c.l.b16 %v239
        %v337 = vunpack.c.h.b16 %v239
        %v338 = vunpack.c.l.b16 %v240
        %v339 = vunpack.c.h.b16 %v240
        %v340 = vunpack.c.l.b16 %v241
        %v341 = vunpack.c.h.b16 %v241
        %v342 = vunpack.c.l.b16 %v242
        %v343 = vunpack.c.h.b16 %v242
        %v344 = vunpack.c.l.b16 %v243
        %v345 = vunpack.c.h.b16 %v243
        %v346 = vunpack.c.l.b16 %v244
        %v347 = vunpack.c.h.b16 %v244
        %v348 = vunpack.c.l.b16 %v245
        %v349 = vunpack.c.h.b16 %v245
        %v350 = vunpack.c.l.b16 %v246
        %v351 = vunpack.c.h.b16 %v246
        %v352 = vunpack.c.l.b16 %v247
        %v353 = vunpack.c.h.b16 %v247
        %v354 = vunpack.c.l.b16 %v248
        %v355 = vunpack.c.h.b16 %v248
        %v356 = vunpack.c.l.b16 %v249
        %v357 = vunpack.c.h.b16 %v249
        %v358 = vunpack.c.l.b16 %v250
        %v359 = vunpack.c.h.b16 %v250
        %v360 = vunpack.c.l.b16 %v251
        %v361 = vunpack.c.h.b16 %v251
        %v362 = vunpack.c.l.b16 %v252
        %v363 = vunpack.c.h.b16 %v252
        %v364 = vunpack.c.l.b16 %v253
        %v365 = vunpack.c.h.b16 %v253
        %v366 = vunpack.c.l.b16 %v254
        %v367 = vunpack.c.h.b16 %v254
        %v368 = vunpack.c.l.b16 %v255
        %v369 = vunpack.c.h.b16 %v255
        %v370 = vunpack.c.l.b16 %v256
        %v371 = vunpack.c.h.b16 %v256
        %v372 = vunpack.c.l.b16 %v257
        %v373 = vunpack.c.h.b16 %v257
        %v374 = vpack.c.b16 %v312, %v310
        %v375 = vpack.c.b16 %v313, %v311
        %v376 = vpack.c.b16 %v316, %v314
        %v377 = vpack.c.b16 %v317, %v315
        %v378 = vpack.c.b16 %v320, %v318
        %v379 = vpack.c.b16 %v321, %v319
        %v380 = vpack.c.b16 %v324, %v322
        %v381 = vpack.c.b16 %v325, %v323
        %v382 = vpack.c.b16 %v328, %v326
        %v383 = vpack.c.b16 %v329, %v327
        %v384 = vpack.c.b16 %v332, %v330
        %v385 = vpack.c.b16 %v333, %v331
        %v386 = vpack.c.b16 %v336, %v334
        %v387 = vpack.c.b16 %v337, %v335
        %v388 = vpack.c.b16 %v340, %v338
        %v389 = vpack.c.b16 %v341, %v339
        %v390 = vpack.c.b16 %v344, %v342
        %v391 = vpack.c.b16 %v345, %v343
        %v392 = vpack.c.b16 %v348, %v346
        %v393 = vpack.c.b16 %v349, %v347
        %v394 = vpack.c.b16 %v352, %v350
        %v395 = vpack.c.b16 %v353, %v351
        %v396 = vpack.c.b16 %v356, %v354
        %v397 = vpack.c.b16 %v357, %v355
        %v398 = vpack.c.b16 %v360, %v358
        %v399 = vpack.c.b16 %v361, %v359
        %v400 = vpack.c.b16 %v364, %v362
        %v401 = vpack.c.b16 %v365, %v363
        %v402 = vpack.c.b16 %v368, %v366
        %v403 = vpack.c.b16 %v369, %v367
        %v404 = vpack.c.b16 %v372, %v370
        %v405 = vpack.c.b16 %v373, %v371
        %438 = vmatprep.subr.bf16.mxu0 %v389
        %439 = vmatpush1.bf16.msra.mxu0 %v388
        %440 = vmatprep.subr.bf16.mxu0 %v387
        %441 = vmatpush1.bf16.msra.mxu0 %v386
        %442 = vmatprep.subr.bf16.mxu0 %v385
        %443 = vmatpush1.bf16.msra.mxu0 %v384
        %444 = vmatprep.subr.bf16.mxu0 %v383
        %445 = vmatpush1.bf16.msra.mxu0 %v382
        %446 = vmatprep.subr.bf16.mxu0 %v381
        %447 = vmatpush1.bf16.msra.mxu0 %v380
        %448 = vmatprep.subr.bf16.mxu0 %v379
        %449 = vmatpush1.bf16.msra.mxu0 %v378
        %450 = vmatprep.subr.bf16.mxu0 %v377
        %451 = vmatpush1.bf16.msra.mxu0 %v376
        %452 = vmatprep.subr.bf16.mxu0 %v375
        %453 = vmatpush1.bf16.msra.mxu0 %v374
        %454 = vmatprep.subr.bf16.mxu0 %v405
        %455 = vmatpush2.bf16.msra.mxu0 %v404
        %456 = vmatprep.subr.bf16.mxu0 %v403
        %457 = vmatpush2.bf16.msra.mxu0 %v402
        %458 = vmatprep.subr.bf16.mxu0 %v401
        %459 = vmatpush2.bf16.msra.mxu0 %v400
        %460 = vmatprep.subr.bf16.mxu0 %v399
        %461 = vmatpush2.bf16.msra.mxu0 %v398
        %462 = vmatprep.subr.bf16.mxu0 %v397
        %463 = vmatpush2.bf16.msra.mxu0 %v396
        %464 = vmatprep.subr.bf16.mxu0 %v395
        %465 = vmatpush2.bf16.msra.mxu0 %v394
        %466 = vmatprep.subr.bf16.mxu0 %v393
        %467 = vmatpush2.bf16.msra.mxu0 %v392
        %468 = vmatprep.subr.bf16.mxu0 %v391
        %469 = vmatpush2.bf16.msra.mxu0 %v390
        %470 = vmatprep.mubr.bf16.mxu0 %v271
        %471 = vmatmul.mubr.bf16.gmra.mxu0 %v270
        %v472 = vpop.f32.mrf.mxu0
        %v473 = vadd.f32 0.0, %v472
        %v474 = vpop.f32.mrf.mxu0
        %v475 = vadd.f32 0.0, %v474
        %v476 = vpop.f32.mrf.mxu0
        %v477 = vadd.f32 0.0, %v476
        %v478 = vpop.f32.mrf.mxu0
        %v479 = vadd.f32 0.0, %v478
        %480 = vmatprep.mubr.bf16.mxu0 %v273
        %481 = vmatmul.mubr.bf16.gmra.mxu0 %v272
        %v482 = vpop.f32.mrf.mxu0
        %v483 = vadd.f32 0.0, %v482
        %v484 = vpop.f32.mrf.mxu0
        %v485 = vadd.f32 0.0, %v484
        %v486 = vpop.f32.mrf.mxu0
        %v487 = vadd.f32 0.0, %v486
        %v488 = vpop.f32.mrf.mxu0
        %v489 = vadd.f32 0.0, %v488
        %490 = vdwg.mxu0
        %v491 = vmul.f32 %v473, %v473
        %v492 = vmul.f32 %v475, %v475
        %v493 = vmul.f32 %v477, %v477
        %v494 = vmul.f32 %v479, %v479
        %v495 = vmul.f32 %v483, %v483
        %v496 = vmul.f32 %v485, %v485
        %v497 = vmul.f32 %v487, %v487
        %v498 = vmul.f32 %v489, %v489
        %v499 = vpack.c.bf16 %v493, %v491
        %v500 = vpack.c.bf16 %v494, %v492
        %v501 = vpack.c.bf16 %v497, %v495
        %v502 = vpack.c.bf16 %v498, %v496
        %v503 = vld [vmem:[#allocation7] sm:$0xf]
        %v504 = vld [vmem:[#allocation7 + $0x4] sm:$0xf]
        %v505 = vld [vmem:[#allocation7 + $0x8] sm:$0xf]
        %v506 = vld [vmem:[#allocation7 + $0xc] sm:$0xf]
        %v507 = vld [vmem:[#allocation7 + $0x10] sm:$0xf]
        %v508 = vld [vmem:[#allocation7 + $0x14] sm:$0xf]
        %v509 = vld [vmem:[#allocation7 + $0x18] sm:$0xf]
        %v510 = vld [vmem:[#allocation7 + $0x1c] sm:$0xf]
        %v511 = vld [vmem:[#allocation7 + $0x20] sm:$0xf]
        %v512 = vld [vmem:[#allocation7 + $0x24] sm:$0xf]
        %v513 = vld [vmem:[#allocation7 + $0x28] sm:$0xf]
        %v514 = vld [vmem:[#allocation7 + $0x2c] sm:$0xf]
        %v515 = vld [vmem:[#allocation7 + $0x30] sm:$0xf]
        %v516 = vld [vmem:[#allocation7 + $0x34] sm:$0xf]
        %v517 = vld [vmem:[#allocation7 + $0x38] sm:$0xf]
        %v518 = vld [vmem:[#allocation7 + $0x3c] sm:$0xf]
        %v519 = vld [vmem:[#allocation7 + $0x40] sm:$0xf]
        %v520 = vld [vmem:[#allocation7 + $0x44] sm:$0xf]
        %v521 = vld [vmem:[#allocation7 + $0x48] sm:$0xf]
        %v522 = vld [vmem:[#allocation7 + $0x4c] sm:$0xf]
        %v523 = vld [vmem:[#allocation7 + $0x50] sm:$0xf]
        %v524 = vld [vmem:[#allocation7 + $0x54] sm:$0xf]
        %v525 = vld [vmem:[#allocation7 + $0x58] sm:$0xf]
        %v526 = vld [vmem:[#allocation7 + $0x5c] sm:$0xf]
        %v527 = vld [vmem:[#allocation7 + $0x60] sm:$0xf]
        %v528 = vld [vmem:[#allocation7 + $0x64] sm:$0xf]
        %v529 = vld [vmem:[#allocation7 + $0x68] sm:$0xf]
        %v530 = vld [vmem:[#allocation7 + $0x6c] sm:$0xf]
        %v531 = vld [vmem:[#allocation7 + $0x70] sm:$0xf]
        %v532 = vld [vmem:[#allocation7 + $0x74] sm:$0xf]
        %v533 = vld [vmem:[#allocation7 + $0x78] sm:$0xf]
        %v534 = vld [vmem:[#allocation7 + $0x7c] sm:$0xf]
        %v567 = vunpack.c.l.b16 %v503
        %v568 = vunpack.c.l.b16 %v504
        %v569 = vunpack.c.l.b16 %v505
        %v570 = vunpack.c.l.b16 %v506
        %v571 = vunpack.c.l.b16 %v507
        %v572 = vunpack.c.l.b16 %v508
        %v573 = vunpack.c.l.b16 %v509
        %v574 = vunpack.c.l.b16 %v510
        %v575 = vunpack.c.l.b16 %v511
        %v576 = vunpack.c.l.b16 %v512
        %v577 = vunpack.c.l.b16 %v513
        %v578 = vunpack.c.l.b16 %v514
        %v579 = vunpack.c.l.b16 %v515
        %v580 = vunpack.c.l.b16 %v516
        %v581 = vunpack.c.l.b16 %v517
        %v582 = vunpack.c.l.b16 %v518
        %v583 = vunpack.c.l.b16 %v519
        %v584 = vunpack.c.l.b16 %v520
        %v585 = vunpack.c.l.b16 %v521
        %v586 = vunpack.c.l.b16 %v522
        %v587 = vunpack.c.l.b16 %v523
        %v588 = vunpack.c.l.b16 %v524
        %v589 = vunpack.c.l.b16 %v525
        %v590 = vunpack.c.l.b16 %v526
        %v591 = vunpack.c.l.b16 %v527
        %v592 = vunpack.c.l.b16 %v528
        %v593 = vunpack.c.l.b16 %v529
        %v594 = vunpack.c.l.b16 %v530
        %v595 = vunpack.c.l.b16 %v531
        %v596 = vunpack.c.l.b16 %v532
        %v597 = vunpack.c.l.b16 %v533
        %v598 = vunpack.c.l.b16 %v534
        %v599 = vpack.c.b16 %v568, %v567
        %v600 = vpack.c.b16 %v570, %v569
        %v601 = vpack.c.b16 %v572, %v571
        %v602 = vpack.c.b16 %v574, %v573
        %v603 = vpack.c.b16 %v576, %v575
        %v604 = vpack.c.b16 %v578, %v577
        %v605 = vpack.c.b16 %v580, %v579
        %v606 = vpack.c.b16 %v582, %v581
        %v607 = vpack.c.b16 %v584, %v583
        %v608 = vpack.c.b16 %v586, %v585
        %v609 = vpack.c.b16 %v588, %v587
        %v610 = vpack.c.b16 %v590, %v589
        %v611 = vpack.c.b16 %v592, %v591
        %v612 = vpack.c.b16 %v594, %v593
        %v613 = vpack.c.b16 %v596, %v595
        %v614 = vpack.c.b16 %v598, %v597
        %631 = vmatprep.subr.bf16.mxu0 0
        %632 = vmatpush1.bf16.msra.mxu0 %v606
        %633 = vmatprep.subr.bf16.mxu0 0
        %634 = vmatpush1.bf16.msra.mxu0 %v605
        %635 = vmatprep.subr.bf16.mxu0 0
        %636 = vmatpush1.bf16.msra.mxu0 %v604
        %637 = vmatprep.subr.bf16.mxu0 0
        %638 = vmatpush1.bf16.msra.mxu0 %v603
        %639 = vmatprep.subr.bf16.mxu0 0
        %640 = vmatpush1.bf16.msra.mxu0 %v602
        %641 = vmatprep.subr.bf16.mxu0 0
        %642 = vmatpush1.bf16.msra.mxu0 %v601
        %643 = vmatprep.subr.bf16.mxu0 0
        %644 = vmatpush1.bf16.msra.mxu0 %v600
        %645 = vmatprep.subr.bf16.mxu0 0
        %646 = vmatpush1.bf16.msra.mxu0 %v599
        %647 = vmatprep.subr.bf16.mxu0 0
        %648 = vmatpush2.bf16.msra.mxu0 %v614
        %649 = vmatprep.subr.bf16.mxu0 0
        %650 = vmatpush2.bf16.msra.mxu0 %v613
        %651 = vmatprep.subr.bf16.mxu0 0
        %652 = vmatpush2.bf16.msra.mxu0 %v612
        %653 = vmatprep.subr.bf16.mxu0 0
        %654 = vmatpush2.bf16.msra.mxu0 %v611
        %655 = vmatprep.subr.bf16.mxu0 0
        %656 = vmatpush2.bf16.msra.mxu0 %v610
        %657 = vmatprep.subr.bf16.mxu0 0
        %658 = vmatpush2.bf16.msra.mxu0 %v609
        %659 = vmatprep.subr.bf16.mxu0 0
        %660 = vmatpush2.bf16.msra.mxu0 %v608
        %661 = vmatprep.subr.bf16.mxu0 0
        %662 = vmatpush2.bf16.msra.mxu0 %v607
        %663 = vmatprep.mubr.bf16.mxu0 %v500
        %664 = vmatmul.mubr.bf16.gmra.mxu0 %v499
        %v665 = vpop.f32.mrf.mxu0
        %v666 = vadd.f32 1e-05, %v665
        %v667 = vpop.f32.mrf.mxu0
        %v668 = vpop.f32.mrf.mxu0
        %v669 = vadd.f32 1e-05, %v668
        %v670 = vpop.f32.mrf.mxu0
        %671 = vmatprep.mubr.bf16.mxu0 %v502
        %672 = vmatmul.mubr.bf16.gmra.mxu0 %v501
        %v673 = vpop.f32.mrf.mxu0
        %v674 = vadd.f32 1e-05, %v673
        %v675 = vpop.f32.mrf.mxu0
        %v676 = vpop.f32.mrf.mxu0
        %v677 = vadd.f32 1e-05, %v676
        %v678 = vpop.f32.mrf.mxu0
        %679 = vdwg.mxu0
        %v680 = vlog2.pop %v666
        %v681 = vmul.f32 %v680, 0.6931472
        %v682 = vlog2.pop %v669
        %v683 = vmul.f32 %v682, 0.6931472
        %v684 = vlog2.pop %v674
        %v685 = vmul.f32 %v684, 0.6931472
        %v686 = vlog2.pop %v677
        %v687 = vmul.f32 %v686, 0.6931472
        %v688 = vadd.f32 %v681, 4.5
        %v689 = vadd.f32 %v683, 4.5
        %v690 = vadd.f32 %v685, 4.5
        %v691 = vadd.f32 %v687, 4.5
        %v692 = vrcp.pop 5.0
        %v693 = vmul.f32 %v688, %v692
        %v694 = vmul.f32 %v689, %v692
        %v695 = vmul.f32 %v690, %v692
        %v696 = vmul.f32 %v691, %v692
        %697 = vst [vmem:[%s218] sm:$0xff] %v693
        %698 = vst [vmem:[%s218 + $0x8] sm:$0xff] %v694
        %699 = vst [vmem:[%s218 + $0x10] sm:$0xff] %v695
        %700 = vst [vmem:[%s218 + $0x18] sm:$0xff] %v696
        %s701 = sand.u32 %s97, 1
        %s702 = scalar_lea.sflag [#allocation4], %s701
        %s703 = sand.u32 %s97, 1
        %s704 = smul.addr %s703, 32
        %s705 = scalar_lea.vmem [#allocation8], %s704
        // Predicated region
        $region45: #{tpu_custom_call.1} parent=31 // pred_check
          %p706 = pneg %p107
        $region46: #{tpu_custom_call.1} parent=31 // pred_check_branch
          %708 = sbr.rel (%p706) target = $region48
        $region47: #{tpu_custom_call.1} parent=31 // pred_region
          %s709 = smul.u32 4, %s21
          %s711 = ssub.s32 512, 512
          %712 = vsyncadd %s702, %s711
          %s713 = smul.addr %s709, 128
          %s714 = scalar_lea.hbm %s3, %s713
          %s715 = sshll.u32 %s705, 4
          %s716 = int_to_ptr.vmem [resolvable:$true] %s715
          %721 = dma.vmem_to_hbm [thread:$0]  %s716, 512, %s714, %s702, 128, 128, 8
        $region48: #{tpu_custom_call.1} parent=31 // pred_fallthru
          _
      $region32: #{tpu_custom_call.1} parent=5 // pred_fallthru
        _
      %p722 = scmp.le.s32.totalorder 2, %s16
      // Predicated region
      $region49: #{tpu_custom_call.1} parent=5 // pred_check
        %p723 = pneg %p722
      $region50: #{tpu_custom_call.1} parent=5 // pred_check_branch
        %725 = sbr.rel (%p723) target = $region52
      $region51: #{tpu_custom_call.1} parent=5 // pred_region
        %s726 = ssub.s32 %s16, 2
        // Predicated region
        $region53: #{tpu_custom_call.1} parent=51 // pred_check
          %p727 = pneg %p113
        $region54: #{tpu_custom_call.1} parent=51 // pred_check_branch
          %729 = sbr.rel (%p727) target = $region56
        $region55: #{tpu_custom_call.1} parent=51 // pred_region
          %s730 = sand.u32 %s98, 1
          %s731 = scalar_lea.sflag [#allocation4], %s730
          %s732 = sand.u32 %s98, 1
          %s733 = smul.addr %s732, 32
          %s734 = scalar_lea.vmem [#allocation8], %s733
          %735 = dma.done %s731, 512
        $region56: #{tpu_custom_call.1} parent=51 // pred_fallthru
          _
      $region52: #{tpu_custom_call.1} parent=5 // pred_fallthru
        _
    $region6: #{tpu_custom_call.1} parent=1 // loop_footer
      %s20 = sadd.s32 1, %s16
    $region7: #{tpu_custom_call.1} parent=1 // loop_footer_branch
      %15 = sbr.rel target = $region3
    $region8: #{tpu_custom_call.1} parent=1 // loop_exit
      _
    %736 = vsyncpa [#allocation3], 1
    %s737 = scalar_lea.sflag [#allocation3], 1
    %738 = vsyncpa %s737, 1
    %739 = vsyncpa [#allocation6], 1
    %740 = vsyncpa [#allocation4], 1
    %s741 = scalar_lea.sflag [#allocation4], 1
    %742 = vsyncpa %s741, 1

</llo_original>
